<compile_context>
chip_gen: v6e
topology: v6e:2x2x1
jax: 0.10.0
libtpu: 0.0.40
codegen_flags: <defaults>
</compile_context>

<pallas_src>
import jax
import jax.numpy as jnp
from jax.experimental import pallas as pl
from jax.experimental.pallas import tpu as pltpu


def _se3_exp_map_kernel(tangent_ref, out_ref):
    """tangent_ref: (6, R, 128) f32, planes = [vx, vy, vz, wx, wy, wz],
    cameras packed on (sublane, lane).
    out_ref: (12, R, 128) f32, planes = row-major entries of the (3,4) [R|t]."""
    vx = tangent_ref[0]
    vy = tangent_ref[1]
    vz = tangent_ref[2]
    wx = tangent_ref[3]
    wy = tangent_ref[4]
    wz = tangent_ref[5]

    theta2 = wx * wx + wy * wy + wz * wz
    theta = jnp.sqrt(theta2)
    near_zero = theta < 0.01
    one = jnp.ones_like(theta)
    theta_nz = jnp.where(near_zero, one, theta)

    # Single exact divide; derive higher inverse powers by multiplication.
    inv_theta = 1.0 / theta_nz
    inv_theta2 = inv_theta * inv_theta
    inv_theta3 = inv_theta2 * inv_theta

    sine = jnp.sin(theta)
    cosine = jnp.where(near_zero, 8.0 / (4.0 + theta2) - 1.0, jnp.cos(theta))
    sine_by_theta = jnp.where(near_zero, 0.5 * cosine + 0.5, sine * inv_theta)
    omc_by_theta2 = jnp.where(near_zero, 0.5 * sine_by_theta,
                              (1.0 - cosine) * inv_theta2)

    # Rotation block: omc * (w w^T) + cos(theta) * I (+/-) sin(theta)/theta * [w]_x
    ax = omc_by_theta2 * wx
    ay = omc_by_theta2 * wy
    az = omc_by_theta2 * wz
    sx = sine_by_theta * wx
    sy = sine_by_theta * wy
    sz = sine_by_theta * wz
    axy = ax * wy
    axz = ax * wz
    ayz = ay * wz

    r00 = ax * wx + cosine
    r11 = ay * wy + cosine
    r22 = az * wz + cosine
    r01 = axy - sz
    r10 = axy + sz
    r02 = axz + sy
    r20 = axz - sy
    r12 = ayz - sx
    r21 = ayz + sx

    # Translation block.
    sbt = jnp.where(near_zero, 1.0 - theta2 * (1.0 / 6.0), sine_by_theta)
    omc = jnp.where(near_zero, 0.5 - theta2 * (1.0 / 24.0), omc_by_theta2)
    tms = jnp.where(near_zero, 1.0 / 6.0 - theta2 * (1.0 / 120.0),
                    (theta - sine) * inv_theta3)
    cx = wy * vz - wz * vy          # w x v
    cy = wz * vx - wx * vz
    cz = wx * vy - wy * vx
    wdotv = wx * vx + wy * vy + wz * vz
    tw = tms * wdotv
    t0 = sbt * vx + omc * cx + tw * wx
    t1 = sbt * vy + omc * cy + tw * wy
    t2 = sbt * vz + omc * cz + tw * wz

    # Direct per-plane stores: each is a full unmasked (R,128)-tile store.
    out_ref[0] = r00
    out_ref[1] = r01
    out_ref[2] = r02
    out_ref[3] = t0
    out_ref[4] = r10
    out_ref[5] = r11
    out_ref[6] = r12
    out_ref[7] = t1
    out_ref[8] = r20
    out_ref[9] = r21
    out_ref[10] = r22
    out_ref[11] = t2


def barf_camera_optimizer_forward(pose_adjustment_weight: jax.Array,
                                  indices: jax.Array,
                                  *,
                                  tile_n: int = 8192) -> jax.Array:
    """Pallas equivalent of BARFOptimizer.forward (config.noise_variance=None)."""
    # TODO(synk): optional pose_noise multiplication (noise_variance != None) not implemented.
    n = indices.shape[0]
    # Tiny [N, 6] embedding gather stays in the wrapper (XLA); the per-camera
    # SE(3) exp-map math runs in the Pallas kernel.
    tangent = jnp.take(pose_adjustment_weight, indices.astype(jnp.int32),
                       axis=0).astype(jnp.float32)                   # (N, 6)

    # Validate tile size: packed layout needs whole (8, 128) tiles.
    tile_n = max(1024, (tile_n // 1024) * 1024)
    tile_r = tile_n // 128                                           # multiple of 8

    # Pack cameras on (sublane, lane): camera = row * 128 + lane.
    rows = -(-n // 128)
    rows_pad = max(8, -(-rows // 8) * 8)
    if rows_pad <= tile_r:
        if rows_pad % 16 == 0:
            # Two "parallel" blocks so v7x's two TensorCores both get work
            # (one extra ~0.35 us grid step on single-core chips: noise).
            r_tile = rows_pad // 2
        else:
            r_tile = rows_pad            # single block, no grid bookkeeping
    else:
        rows_pad = -(-rows_pad // tile_r) * tile_r
        r_tile = tile_r
    grid_n = rows_pad // r_tile
    n_pad = rows_pad * 128

    # Single pad of the transposed tangent; zero tangent -> identity (sliced off).
    tangent_t = jnp.pad(tangent.T, ((0, 0), (0, n_pad - n)))         # (6, n_pad)
    tangent_packed = tangent_t.reshape(6, rows_pad, 128)             # free reshape

    out_shape = jax.ShapeDtypeStruct((12, rows_pad, 128), jnp.float32)
    if grid_n == 1:
        # Single block: explicit full-array VMEM placement, no pipeline.
        out = pl.pallas_call(
            _se3_exp_map_kernel,
            out_shape=out_shape,
            in_specs=[pl.BlockSpec(memory_space=pltpu.MemorySpace.VMEM)],
            out_specs=pl.BlockSpec(memory_space=pltpu.MemorySpace.VMEM),
        )(tangent_packed)
    else:
        out = pl.pallas_call(
            _se3_exp_map_kernel,
            out_shape=out_shape,
            grid=(grid_n,),
            in_specs=[pl.BlockSpec((6, r_tile, 128), lambda i: (0, i, 0))],
            out_specs=pl.BlockSpec((12, r_tile, 128), lambda i: (0, i, 0)),
            compiler_params=pltpu.CompilerParams(
                dimension_semantics=("parallel",)),
        )(tangent_packed)

    # (12, rows_pad, 128) -> (12, n_pad) -> (N, 3, 4) (row-major layout match).
    return out.reshape(12, n_pad)[:, :n].T.reshape(n, 3, 4)


def _exp_map_ref(tangent: jax.Array) -> jax.Array:
    """Pure-JAX port of BARFOptimizer.exp_map for correctness checks."""
    lin = tangent[:, :3]
    ang = tangent[:, 3:]
    theta = jnp.linalg.norm(ang, axis=1, keepdims=True)          # (N, 1)
    theta2 = theta ** 2
    theta3 = theta ** 3
    near_zero = theta < 0.01
    one = jnp.ones_like(theta)
    theta_nz = jnp.where(near_zero, one, theta)
    theta2_nz = jnp.where(near_zero, one, theta2)
    theta3_nz = jnp.where(near_zero, one, theta3)
    sine = jnp.sin(theta)
    cosine = jnp.where(near_zero, 8.0 / (4.0 + theta2) - 1.0, jnp.cos(theta))
    sine_by_theta = jnp.where(near_zero, 0.5 * cosine + 0.5, sine / theta_nz)
    omc_by_t2 = jnp.where(near_zero, 0.5 * sine_by_theta, (1.0 - cosine) / theta2_nz)

    n = tangent.shape[0]
    rot = omc_by_t2[:, :, None] * (ang[:, :, None] @ ang[:, None, :])
    rot = rot + cosine[:, :, None] * jnp.eye(3, dtype=tangent.dtype)[None]
    temp = sine_by_theta * ang
    skew = jnp.zeros((n, 3, 3), tangent.dtype)
    skew = skew.at[:, 0, 1].add(-temp[:, 2]).at[:, 1, 0].add(temp[:, 2])
    skew = skew.at[:, 0, 2].add(temp[:, 1]).at[:, 2, 0].add(-temp[:, 1])
    skew = skew.at[:, 1, 2].add(-temp[:, 0]).at[:, 2, 1].add(temp[:, 0])
    rot = rot + skew

    sbt = jnp.where(near_zero, 1.0 - theta2 / 6.0, sine_by_theta)
    omc = jnp.where(near_zero, 0.5 - theta2 / 24.0, omc_by_t2)
    tms = jnp.where(near_zero, 1.0 / 6.0 - theta2 / 120.0, (theta - sine) / theta3_nz)
    wdotv = jnp.sum(ang * lin, axis=1, keepdims=True)
    trans = sbt * lin + omc * jnp.cross(ang, lin) + tms * wdotv * ang
    return jnp.concatenate([rot, trans[:, :, None]], axis=2)


if __name__ == "__main__":
    key = jax.random.PRNGKey(0)
    k_idx, k_w = jax.random.split(key)
    num_cameras_total = 16
    batch = 8  # number of camera indices queried in this forward call
    indices = jax.random.randint(k_idx, (batch,), 0, num_cameras_total, dtype=jnp.int32)

    # Case 1: zero-initialized pose_adjustment (nn.init.zeros_) -> identity [R|t].
    weight_zero = jnp.zeros((num_cameras_total, 6), jnp.float32)
    out0 = jax.block_until_ready(barf_camera_optimizer_forward(weight_zero, indices))
    ref0 = jnp.broadcast_to(jnp.eye(4, dtype=jnp.float32)[:3, :4], (batch, 3, 4))
    assert out0.shape == (batch, 3, 4), out0.shape
    assert out0.dtype == jnp.float32, out0.dtype
    assert jnp.allclose(out0, ref0, atol=1e-6), "mismatch vs identity reference"

    # Case 2: random tangent vectors (covers generic and near-zero-theta branches).
    weight = jax.random.normal(k_w, (num_cameras_total, 6), jnp.float32) * 0.5
    weight = weight.at[0].set(weight[0] * 1e-4)  # force a near-zero-theta camera
    out1 = jax.block_until_ready(barf_camera_optimizer_forward(weight, indices))
    ref1 = _exp_map_ref(jnp.take(weight, indices, axis=0))
    assert jnp.allclose(out1, ref1, rtol=1e-5, atol=1e-6), "mismatch vs exp_map reference"

    # Case 3: exercise the multi-block grid path (cameras > one tile of rows).
    big_n = 3000
    big_idx = jax.random.randint(k_idx, (big_n,), 0, num_cameras_total, dtype=jnp.int32)
    out2 = jax.block_until_ready(
        barf_camera_optimizer_forward(weight, big_idx, tile_n=1024))
    ref2 = _exp_map_ref(jnp.take(weight, big_idx, axis=0))
    assert out2.shape == (big_n, 3, 4), out2.shape
    assert jnp.allclose(out2, ref2, rtol=1e-5, atol=1e-6), "mismatch on grid path"

    print("KERNEL_OK")
</pallas_src>

<mosaic_0001>
module attributes {stable_mosaic.version = 11 : i64} {
  func.func @_se3_exp_map_kernel(%arg0: memref<6x8x128xf32, #tpu.memory_space<vmem>>, %arg1: memref<12x8x128xf32, #tpu.memory_space<vmem>>) attributes {dimension_semantics = [], scalar_prefetch = 0 : i64, scratch_operands = 0 : i64, tpu.core_type = #tpu.core_type<tc>} {
    %c0 = arith.constant 0 : index
    %c0_0 = arith.constant 0 : index
    %c0_1 = arith.constant 0 : index
    %0 = vector.load %arg0[%c0, %c0_0, %c0_1] : memref<6x8x128xf32, #tpu.memory_space<vmem>>, vector<1x8x128xf32>
    %1 = vector.shape_cast %0 : vector<1x8x128xf32> to vector<8x128xf32>
    %c1 = arith.constant 1 : index
    %c0_2 = arith.constant 0 : index
    %c0_3 = arith.constant 0 : index
    %2 = vector.load %arg0[%c1, %c0_2, %c0_3] : memref<6x8x128xf32, #tpu.memory_space<vmem>>, vector<1x8x128xf32>
    %3 = vector.shape_cast %2 : vector<1x8x128xf32> to vector<8x128xf32>
    %c2 = arith.constant 2 : index
    %c0_4 = arith.constant 0 : index
    %c0_5 = arith.constant 0 : index
    %4 = vector.load %arg0[%c2, %c0_4, %c0_5] : memref<6x8x128xf32, #tpu.memory_space<vmem>>, vector<1x8x128xf32>
    %5 = vector.shape_cast %4 : vector<1x8x128xf32> to vector<8x128xf32>
    %c3 = arith.constant 3 : index
    %c0_6 = arith.constant 0 : index
    %c0_7 = arith.constant 0 : index
    %6 = vector.load %arg0[%c3, %c0_6, %c0_7] : memref<6x8x128xf32, #tpu.memory_space<vmem>>, vector<1x8x128xf32>
    %7 = vector.shape_cast %6 : vector<1x8x128xf32> to vector<8x128xf32>
    %c4 = arith.constant 4 : index
    %c0_8 = arith.constant 0 : index
    %c0_9 = arith.constant 0 : index
    %8 = vector.load %arg0[%c4, %c0_8, %c0_9] : memref<6x8x128xf32, #tpu.memory_space<vmem>>, vector<1x8x128xf32>
    %9 = vector.shape_cast %8 : vector<1x8x128xf32> to vector<8x128xf32>
    %c5 = arith.constant 5 : index
    %c0_10 = arith.constant 0 : index
    %c0_11 = arith.constant 0 : index
    %10 = vector.load %arg0[%c5, %c0_10, %c0_11] : memref<6x8x128xf32, #tpu.memory_space<vmem>>, vector<1x8x128xf32>
    %11 = vector.shape_cast %10 : vector<1x8x128xf32> to vector<8x128xf32>
    %12 = arith.mulf %7, %7 : vector<8x128xf32>
    %13 = arith.mulf %9, %9 : vector<8x128xf32>
    %14 = arith.addf %12, %13 : vector<8x128xf32>
    %15 = arith.mulf %11, %11 : vector<8x128xf32>
    %16 = arith.addf %14, %15 : vector<8x128xf32>
    %17 = math.sqrt %16 : vector<8x128xf32>
    %cst = arith.constant 0.00999999977 : f32
    %18 = vector.broadcast %cst : f32 to vector<8x128xf32>
    %19 = arith.cmpf olt, %17, %18 : vector<8x128xf32>
    %cst_12 = arith.constant 1.000000e+00 : f32
    %20 = vector.broadcast %cst_12 : f32 to vector<8x128xf32>
    %21 = arith.select %19, %20, %17 : vector<8x128xi1>, vector<8x128xf32>
    %cst_13 = arith.constant 1.000000e+00 : f32
    %22 = vector.broadcast %cst_13 : f32 to vector<8x128xf32>
    %23 = arith.divf %22, %21 : vector<8x128xf32>
    %24 = arith.mulf %23, %23 : vector<8x128xf32>
    %25 = arith.mulf %24, %23 : vector<8x128xf32>
    %26 = math.sin %17 : vector<8x128xf32>
    %cst_14 = arith.constant 4.000000e+00 : f32
    %27 = vector.broadcast %cst_14 : f32 to vector<8x128xf32>
    %28 = arith.addf %27, %16 : vector<8x128xf32>
    %cst_15 = arith.constant 8.000000e+00 : f32
    %29 = vector.broadcast %cst_15 : f32 to vector<8x128xf32>
    %30 = arith.divf %29, %28 : vector<8x128xf32>
    %cst_16 = arith.constant 1.000000e+00 : f32
    %31 = vector.broadcast %cst_16 : f32 to vector<8x128xf32>
    %32 = arith.subf %30, %31 : vector<8x128xf32>
    %33 = math.cos %17 : vector<8x128xf32>
    %34 = arith.select %19, %32, %33 : vector<8x128xi1>, vector<8x128xf32>
    %cst_17 = arith.constant 5.000000e-01 : f32
    %35 = vector.broadcast %cst_17 : f32 to vector<8x128xf32>
    %36 = arith.mulf %35, %34 : vector<8x128xf32>
    %cst_18 = arith.constant 5.000000e-01 : f32
    %37 = vector.broadcast %cst_18 : f32 to vector<8x128xf32>
    %38 = arith.addf %36, %37 : vector<8x128xf32>
    %39 = arith.mulf %26, %23 : vector<8x128xf32>
    %40 = arith.select %19, %38, %39 : vector<8x128xi1>, vector<8x128xf32>
    %cst_19 = arith.constant 5.000000e-01 : f32
    %41 = vector.broadcast %cst_19 : f32 to vector<8x128xf32>
    %42 = arith.mulf %41, %40 : vector<8x128xf32>
    %cst_20 = arith.constant 1.000000e+00 : f32
    %43 = vector.broadcast %cst_20 : f32 to vector<8x128xf32>
    %44 = arith.subf %43, %34 : vector<8x128xf32>
    %45 = arith.mulf %44, %24 : vector<8x128xf32>
    %46 = arith.select %19, %42, %45 : vector<8x128xi1>, vector<8x128xf32>
    %47 = arith.mulf %46, %7 : vector<8x128xf32>
    %48 = arith.mulf %46, %9 : vector<8x128xf32>
    %49 = arith.mulf %46, %11 : vector<8x128xf32>
    %50 = arith.mulf %40, %7 : vector<8x128xf32>
    %51 = arith.mulf %40, %9 : vector<8x128xf32>
    %52 = arith.mulf %40, %11 : vector<8x128xf32>
    %53 = arith.mulf %47, %9 : vector<8x128xf32>
    %54 = arith.mulf %47, %11 : vector<8x128xf32>
    %55 = arith.mulf %48, %11 : vector<8x128xf32>
    %56 = arith.mulf %47, %7 : vector<8x128xf32>
    %57 = arith.addf %56, %34 : vector<8x128xf32>
    %58 = arith.mulf %48, %9 : vector<8x128xf32>
    %59 = arith.addf %58, %34 : vector<8x128xf32>
    %60 = arith.mulf %49, %11 : vector<8x128xf32>
    %61 = arith.addf %60, %34 : vector<8x128xf32>
    %62 = arith.subf %53, %52 : vector<8x128xf32>
    %63 = arith.addf %53, %52 : vector<8x128xf32>
    %64 = arith.addf %54, %51 : vector<8x128xf32>
    %65 = arith.subf %54, %51 : vector<8x128xf32>
    %66 = arith.subf %55, %50 : vector<8x128xf32>
    %67 = arith.addf %55, %50 : vector<8x128xf32>
    %cst_21 = arith.constant 0.166666672 : f32
    %68 = vector.broadcast %cst_21 : f32 to vector<8x128xf32>
    %69 = arith.mulf %16, %68 : vector<8x128xf32>
    %cst_22 = arith.constant 1.000000e+00 : f32
    %70 = vector.broadcast %cst_22 : f32 to vector<8x128xf32>
    %71 = arith.subf %70, %69 : vector<8x128xf32>
    %72 = arith.select %19, %71, %40 : vector<8x128xi1>, vector<8x128xf32>
    %cst_23 = arith.constant 0.0416666679 : f32
    %73 = vector.broadcast %cst_23 : f32 to vector<8x128xf32>
    %74 = arith.mulf %16, %73 : vector<8x128xf32>
    %cst_24 = arith.constant 5.000000e-01 : f32
    %75 = vector.broadcast %cst_24 : f32 to vector<8x128xf32>
    %76 = arith.subf %75, %74 : vector<8x128xf32>
    %77 = arith.select %19, %76, %46 : vector<8x128xi1>, vector<8x128xf32>
    %cst_25 = arith.constant 0.00833333377 : f32
    %78 = vector.broadcast %cst_25 : f32 to vector<8x128xf32>
    %79 = arith.mulf %16, %78 : vector<8x128xf32>
    %cst_26 = arith.constant 0.166666672 : f32
    %80 = vector.broadcast %cst_26 : f32 to vector<8x128xf32>
    %81 = arith.subf %80, %79 : vector<8x128xf32>
    %82 = arith.subf %17, %26 : vector<8x128xf32>
    %83 = arith.mulf %82, %25 : vector<8x128xf32>
    %84 = arith.select %19, %81, %83 : vector<8x128xi1>, vector<8x128xf32>
    %85 = arith.mulf %9, %5 : vector<8x128xf32>
    %86 = arith.mulf %11, %3 : vector<8x128xf32>
    %87 = arith.subf %85, %86 : vector<8x128xf32>
    %88 = arith.mulf %11, %1 : vector<8x128xf32>
    %89 = arith.mulf %7, %5 : vector<8x128xf32>
    %90 = arith.subf %88, %89 : vector<8x128xf32>
    %91 = arith.mulf %7, %3 : vector<8x128xf32>
    %92 = arith.mulf %9, %1 : vector<8x128xf32>
    %93 = arith.subf %91, %92 : vector<8x128xf32>
    %94 = arith.mulf %7, %1 : vector<8x128xf32>
    %95 = arith.mulf %9, %3 : vector<8x128xf32>
    %96 = arith.addf %94, %95 : vector<8x128xf32>
    %97 = arith.mulf %11, %5 : vector<8x128xf32>
    %98 = arith.addf %96, %97 : vector<8x128xf32>
    %99 = arith.mulf %84, %98 : vector<8x128xf32>
    %100 = arith.mulf %72, %1 : vector<8x128xf32>
    %101 = arith.mulf %77, %87 : vector<8x128xf32>
    %102 = arith.addf %100, %101 : vector<8x128xf32>
    %103 = arith.mulf %99, %7 : vector<8x128xf32>
    %104 = arith.addf %102, %103 : vector<8x128xf32>
    %105 = arith.mulf %72, %3 : vector<8x128xf32>
    %106 = arith.mulf %77, %90 : vector<8x128xf32>
    %107 = arith.addf %105, %106 : vector<8x128xf32>
    %108 = arith.mulf %99, %9 : vector<8x128xf32>
    %109 = arith.addf %107, %108 : vector<8x128xf32>
    %110 = arith.mulf %72, %5 : vector<8x128xf32>
    %111 = arith.mulf %77, %93 : vector<8x128xf32>
    %112 = arith.addf %110, %111 : vector<8x128xf32>
    %113 = arith.mulf %99, %11 : vector<8x128xf32>
    %114 = arith.addf %112, %113 : vector<8x128xf32>
    %c0_27 = arith.constant 0 : index
    %c0_28 = arith.constant 0 : index
    %c0_29 = arith.constant 0 : index
    %115 = vector.load %arg1[%c0_27, %c0_28, %c0_29] : memref<12x8x128xf32, #tpu.memory_space<vmem>>, vector<1x8x128xf32>
    %116 = vector.shape_cast %115 : vector<1x8x128xf32> to vector<8x128xf32>
    %117 = vector.shape_cast %57 : vector<8x128xf32> to vector<1x8x128xf32>
    tpu.vector_store %arg1[%c0_27, %c0_28, %c0_29], %117 {strides = array<i32>} : memref<12x8x128xf32, #tpu.memory_space<vmem>>, vector<1x8x128xf32>,
    %c1_30 = arith.constant 1 : index
    %c0_31 = arith.constant 0 : index
    %c0_32 = arith.constant 0 : index
    %118 = vector.load %arg1[%c1_30, %c0_31, %c0_32] : memref<12x8x128xf32, #tpu.memory_space<vmem>>, vector<1x8x128xf32>
    %119 = vector.shape_cast %118 : vector<1x8x128xf32> to vector<8x128xf32>
    %120 = vector.shape_cast %62 : vector<8x128xf32> to vector<1x8x128xf32>
    tpu.vector_store %arg1[%c1_30, %c0_31, %c0_32], %120 {strides = array<i32>} : memref<12x8x128xf32, #tpu.memory_space<vmem>>, vector<1x8x128xf32>,
    %c2_33 = arith.constant 2 : index
    %c0_34 = arith.constant 0 : index
    %c0_35 = arith.constant 0 : index
    %121 = vector.load %arg1[%c2_33, %c0_34, %c0_35] : memref<12x8x128xf32, #tpu.memory_space<vmem>>, vector<1x8x128xf32>
    %122 = vector.shape_cast %121 : vector<1x8x128xf32> to vector<8x128xf32>
    %123 = vector.shape_cast %64 : vector<8x128xf32> to vector<1x8x128xf32>
    tpu.vector_store %arg1[%c2_33, %c0_34, %c0_35], %123 {strides = array<i32>} : memref<12x8x128xf32, #tpu.memory_space<vmem>>, vector<1x8x128xf32>,
    %c3_36 = arith.constant 3 : index
    %c0_37 = arith.constant 0 : index
    %c0_38 = arith.constant 0 : index
    %124 = vector.load %arg1[%c3_36, %c0_37, %c0_38] : memref<12x8x128xf32, #tpu.memory_space<vmem>>, vector<1x8x128xf32>
    %125 = vector.shape_cast %124 : vector<1x8x128xf32> to vector<8x128xf32>
    %126 = vector.shape_cast %104 : vector<8x128xf32> to vector<1x8x128xf32>
    tpu.vector_store %arg1[%c3_36, %c0_37, %c0_38], %126 {strides = array<i32>} : memref<12x8x128xf32, #tpu.memory_space<vmem>>, vector<1x8x128xf32>,
    %c4_39 = arith.constant 4 : index
    %c0_40 = arith.constant 0 : index
    %c0_41 = arith.constant 0 : index
    %127 = vector.load %arg1[%c4_39, %c0_40, %c0_41] : memref<12x8x128xf32, #tpu.memory_space<vmem>>, vector<1x8x128xf32>
    %128 = vector.shape_cast %127 : vector<1x8x128xf32> to vector<8x128xf32>
    %129 = vector.shape_cast %63 : vector<8x128xf32> to vector<1x8x128xf32>
    tpu.vector_store %arg1[%c4_39, %c0_40, %c0_41], %129 {strides = array<i32>} : memref<12x8x128xf32, #tpu.memory_space<vmem>>, vector<1x8x128xf32>,
    %c5_42 = arith.constant 5 : index
    %c0_43 = arith.constant 0 : index
    %c0_44 = arith.constant 0 : index
    %130 = vector.load %arg1[%c5_42, %c0_43, %c0_44] : memref<12x8x128xf32, #tpu.memory_space<vmem>>, vector<1x8x128xf32>
    %131 = vector.shape_cast %130 : vector<1x8x128xf32> to vector<8x128xf32>
    %132 = vector.shape_cast %59 : vector<8x128xf32> to vector<1x8x128xf32>
    tpu.vector_store %arg1[%c5_42, %c0_43, %c0_44], %132 {strides = array<i32>} : memref<12x8x128xf32, #tpu.memory_space<vmem>>, vector<1x8x128xf32>,
    %c6 = arith.constant 6 : index
    %c0_45 = arith.constant 0 : index
    %c0_46 = arith.constant 0 : index
    %133 = vector.load %arg1[%c6, %c0_45, %c0_46] : memref<12x8x128xf32, #tpu.memory_space<vmem>>, vector<1x8x128xf32>
    %134 = vector.shape_cast %133 : vector<1x8x128xf32> to vector<8x128xf32>
    %135 = vector.shape_cast %66 : vector<8x128xf32> to vector<1x8x128xf32>
    tpu.vector_store %arg1[%c6, %c0_45, %c0_46], %135 {strides = array<i32>} : memref<12x8x128xf32, #tpu.memory_space<vmem>>, vector<1x8x128xf32>,
    %c7 = arith.constant 7 : index
    %c0_47 = arith.constant 0 : index
    %c0_48 = arith.constant 0 : index
    %136 = vector.load %arg1[%c7, %c0_47, %c0_48] : memref<12x8x128xf32, #tpu.memory_space<vmem>>, vector<1x8x128xf32>
    %137 = vector.shape_cast %136 : vector<1x8x128xf32> to vector<8x128xf32>
    %138 = vector.shape_cast %109 : vector<8x128xf32> to vector<1x8x128xf32>
    tpu.vector_store %arg1[%c7, %c0_47, %c0_48], %138 {strides = array<i32>} : memref<12x8x128xf32, #tpu.memory_space<vmem>>, vector<1x8x128xf32>,
    %c8 = arith.constant 8 : index
    %c0_49 = arith.constant 0 : index
    %c0_50 = arith.constant 0 : index
    %139 = vector.load %arg1[%c8, %c0_49, %c0_50] : memref<12x8x128xf32, #tpu.memory_space<vmem>>, vector<1x8x128xf32>
    %140 = vector.shape_cast %139 : vector<1x8x128xf32> to vector<8x128xf32>
    %141 = vector.shape_cast %65 : vector<8x128xf32> to vector<1x8x128xf32>
    tpu.vector_store %arg1[%c8, %c0_49, %c0_50], %141 {strides = array<i32>} : memref<12x8x128xf32, #tpu.memory_space<vmem>>, vector<1x8x128xf32>,
    %c9 = arith.constant 9 : index
    %c0_51 = arith.constant 0 : index
    %c0_52 = arith.constant 0 : index
    %142 = vector.load %arg1[%c9, %c0_51, %c0_52] : memref<12x8x128xf32, #tpu.memory_space<vmem>>, vector<1x8x128xf32>
    %143 = vector.shape_cast %142 : vector<1x8x128xf32> to vector<8x128xf32>
    %144 = vector.shape_cast %67 : vector<8x128xf32> to vector<1x8x128xf32>
    tpu.vector_store %arg1[%c9, %c0_51, %c0_52], %144 {strides = array<i32>} : memref<12x8x128xf32, #tpu.memory_space<vmem>>, vector<1x8x128xf32>,
    %c10 = arith.constant 10 : index
    %c0_53 = arith.constant 0 : index
    %c0_54 = arith.constant 0 : index
    %145 = vector.load %arg1[%c10, %c0_53, %c0_54] : memref<12x8x128xf32, #tpu.memory_space<vmem>>, vector<1x8x128xf32>
    %146 = vector.shape_cast %145 : vector<1x8x128xf32> to vector<8x128xf32>
    %147 = vector.shape_cast %61 : vector<8x128xf32> to vector<1x8x128xf32>
    tpu.vector_store %arg1[%c10, %c0_53, %c0_54], %147 {strides = array<i32>} : memref<12x8x128xf32, #tpu.memory_space<vmem>>, vector<1x8x128xf32>,
    %c11 = arith.constant 11 : index
    %c0_55 = arith.constant 0 : index
    %c0_56 = arith.constant 0 : index
    %148 = vector.load %arg1[%c11, %c0_55, %c0_56] : memref<12x8x128xf32, #tpu.memory_space<vmem>>, vector<1x8x128xf32>
    %149 = vector.shape_cast %148 : vector<1x8x128xf32> to vector<8x128xf32>
    %150 = vector.shape_cast %114 : vector<8x128xf32> to vector<1x8x128xf32>
    tpu.vector_store %arg1[%c11, %c0_55, %c0_56], %150 {strides = array<i32>} : memref<12x8x128xf32, #tpu.memory_space<vmem>>, vector<1x8x128xf32>,
    return
  }
}

</mosaic_0001>

<llo_original>
// kernel: tpu_custom_call.1
$region0: #{tpu_custom_call.1}
  #allocation0 [shape = 'u32[]', space=smem, size = 0x4, offset = 0x4, fixed_abs, tag = 'smem constant byte address 0x4 - core index']
  #allocation1 [shape = 'u32[144,128]{1,0:T(1,128)}', space=vmem, size = 0x12000, scoped, tag = 'internal scratch']
  %s0 = inlined_call_operand.hbm [shape: f32[6,8,128], index: 0, kind: input, shape index: {}]
  %s1 = inlined_call_operand.hbm [shape: f32[12,8,128], index: 1, kind: output, shape index: {}]
  %s2 = sld [smem:[#allocation0]]
  $region18: #{tpu_custom_call.1} parent=0
    _
  %s4 = ssub.s32 1, %s2
  %s5 = scalar_select 0, %s4, %s2
  $region1: #{tpu_custom_call.1} parent=0
    #allocation2 [shape = 'u8[24576]{0}', space=vmem, size = 0x6000, scoped, tag = 'input window, operand 0, single buffered']
    #allocation3 [shape = 's32[1]{0}', space=sflag, size = 0x4, scoped, tag = 'scoped memory for tpu_custom_call.1']
    #allocation4 [shape = 's32[1]{0}', space=sflag, size = 0x4, scoped, tag = 'scoped memory for tpu_custom_call.1']
    #allocation5 [shape = 'u8[49152]{0}', space=vmem, size = 0xc000, scoped, tag = 'output window, operand 0, single buffered']
    %6 = vsyncpa [#allocation3], 0
    %7 = vsyncpa [#allocation4], 0
    // Predicated region
    $region2: #{tpu_custom_call.1} parent=1 // pred_check
      _
    $region3: #{tpu_custom_call.1} parent=1 // pred_check_branch
      %9 = sbr.rel (0) target = $region5
    $region4: #{tpu_custom_call.1} parent=1 // pred_region
      %s11 = ssub.s32 768, 768
      %12 = vsyncadd [#allocation3], %s11
      %s13 = sshll.u32 [#allocation2], 4
      %s14 = int_to_ptr.vmem [resolvable:$true] %s13
      %19 = dma.hbm_to_vmem [thread:$0]  %s0, 768, %s14, [#allocation3], 128, 128, 8
    $region5: #{tpu_custom_call.1} parent=1 // pred_fallthru
      _
    // Predicated region
    $region6: #{tpu_custom_call.1} parent=1 // pred_check
      _
    $region7: #{tpu_custom_call.1} parent=1 // pred_check_branch
      %21 = sbr.rel (0) target = $region9
    $region8: #{tpu_custom_call.1} parent=1 // pred_region
      %22 = dma.done [#allocation3], 768
    $region9: #{tpu_custom_call.1} parent=1 // pred_fallthru
      _
    %v23 = vld [vmem:[#allocation2] sm:$0xff]
    %s24 = scalar_lea.vmem [#allocation2], 8
    %v25 = vld [vmem:[%s24] sm:$0xff]
    %s26 = scalar_lea.vmem [#allocation2], 16
    %v27 = vld [vmem:[%s26] sm:$0xff]
    %s28 = scalar_lea.vmem [#allocation2], 24
    %v29 = vld [vmem:[%s28] sm:$0xff]
    %s30 = scalar_lea.vmem [#allocation2], 32
    %v31 = vld [vmem:[%s30] sm:$0xff]
    %s32 = scalar_lea.vmem [#allocation2], 40
    %v33 = vld [vmem:[%s32] sm:$0xff]
    %v34 = vmul.f32 %v29, %v29
    %v35 = vmul.f32 %v31, %v31
    %v36 = vadd.f32 %v34, %v35
    %v37 = vmul.f32 %v33, %v33
    %v38 = vadd.f32 %v36, %v37
    %v39 = vrsqrt.pop %v38
    %v40 = vmul.f32 %v38, %v39
    %vm41 = vcmp.eq.f32.partialorder %v38, inf
    %v42 = vsel %vm41, %v38, %v40
    %vm43 = vcmp.eq.f32.partialorder %v38, 0.0
    %v44 = vand.u32 %v38, 2147483648
    %v45 = vsel %vm43, %v44, %v42
    %vm46 = vcmp.lt.f32.partialorder %v45, 0.01
    %v47 = vsel %vm46, 1.0, %v45
    %v48 = vrcp.pop %v47
    %v49 = vmul.f32 1.0, %v48
    %v50 = vmul.f32 %v49, %v49
    %v51 = vmul.f32 %v50, %v49
    %v52 = vand.u32 2147483647, %v45
    %vm53 = vcmp.le.f32.partialorder %v52, 0.7853982
    %vm54 = vcmp.lt.s32.totalorder %v45, 0
    %v55 = vand.u32 %v45, 2139095040
    %v56 = vshrl.u32 %v55, 23
    %v57 = vsub.s32 %v56, 127
    %v58 = vand.u32 2147483647, %v45
    %v59 = vand.u32 %v58, 8388607
    %v60 = vor.u32 %v59, 8388608
    %v61 = vsub.s32 0, %v60
    %v62 = vadd.s32 %v57, 1
    %vm63 = vcmp.gt.s32.totalorder %v62, 0
    %v64 = vsel %vm63, %v62, 0
    %v65 = vshrl.u32 %v64, 5
    %v66 = vand.u32 %v64, 31
    %v67 = vsub.s32 32, %v66
    %v68 = vshrl.u32 683565275, %v67
    %v69 = vshll.u32 683565275, %v66
    %v70 = vshrl.u32 2475754826, %v67
    %v71 = vor.u32 %v69, %v70
    %v72 = vshll.u32 2475754826, %v66
    %v73 = vshrl.u32 2131351028, %v67
    %v74 = vor.u32 %v72, %v73
    %v75 = vshll.u32 2131351028, %v66
    %v76 = vshrl.u32 2102212464, %v67
    %v77 = vor.u32 %v75, %v76
    %v78 = vshll.u32 2102212464, %v66
    %v79 = vshrl.u32 920167782, %v67
    %v80 = vor.u32 %v78, %v79
    %v81 = vshll.u32 920167782, %v66
    %v82 = vshrl.u32 1326507024, %v67
    %v83 = vor.u32 %v81, %v82
    %vm84 = vcmp.lt.s32.totalorder %v65, 1
    %vm85 = vcmp.lt.s32.totalorder %v65, 2
    %vm86 = vcmp.lt.s32.totalorder %v65, 3
    %vm87 = vcmp.lt.s32.totalorder %v65, 4
    %v88 = vsel %vm84, %v68, %v71
    %v89 = vsel %vm87, %v77, 2102212464
    %v90 = vsel %vm86, %v74, %v89
    %v91 = vsel %vm85, %v88, %v90
    %v92 = vsel %vm84, %v71, %v74
    %v93 = vsel %vm87, %v80, 920167782
    %v94 = vsel %vm86, %v77, %v93
    %v95 = vsel %vm85, %v92, %v94
    %v96 = vsel %vm84, %v74, %v77
    %v97 = vsel %vm87, %v83, 1326507024
    %v98 = vsel %vm86, %v80, %v97
    %v99 = vsel %vm85, %v96, %v98
    %v100 = vshll.u32 %v60, 8
    %v101 = vmul.u32.u64.compose %v100, %v99
    %v102 = vextract.low.u32 %v101
    %v103 = vextract.high.u32 %v101
    %v104 = vmul.u32.u64.compose %v100, %v95
    %v105 = vextract.low.u32 %v104
    %v106 = vextract.high.u32 %v104
    %v107 = vmul.u32 %v100, %v91
    %v108 = vadd.s32 %v103, %v105
    %vm109 = vc.u32 %v103, %v105
    %v110 = vadd.s32 %v106, 1
    %v111 = vsel %vm109, %v110, %v106
    %v112 = vadd.s32 %v107, %v111
    %v113 = vadd.s32 %v112, 536870912
    %v114 = vshrl.u32 %v113, 30
    %v115 = vshll.u32 %v114, 30
    %v116 = vsub.s32 %v112, %v115
    %vm117 = vcmp.lt.s32.totalorder %v116, 0
    %v118 = vsub.s32 0, %v116
    %v119 = vsel %vm117, %v118, %v116
    %v120 = vclz %v119
    %v121 = vsub.s32 %v120, 2
    %vm122 = vcmp.gt.s32.totalorder 0, %v121
    %v123 = vsel %vm122, 0, %v121
    %v124 = vsub.s32 32, %v123
    %v125 = vshll.u32 %v116, %v123
    %v126 = vshrl.u32 %v108, %v124
    %v127 = vor.u32 %v125, %v126
    %v128 = vsub.s32 4294967266, %v123
    %v129 = vadd.s32 %v128, 127
    %v130 = vshll.u32 %v129, 23
    %v131 = vor.u32 4788187, %v130
    %v132 = vand.u32 2147483647, %v131
    %v134 = vcvt.s32.f32 %v127
    %v135 = vmul.f32 %v134, %v132
    %v136 = vxor.u32 %v135, 2147483648
    %v137 = vsel %vm54, %v136, %v135
    %v138 = vsub.s32 4, %v114
    %v139 = vsel %vm54, %v138, %v114
    %v140 = vsel %vm53, %v45, %v137
    %v141 = vsel %vm53, 0, %v139
    %v142 = vcosq.f32.pop %v140
    %v143 = vsinq.f32.pop %v140
    %vm144 = vweird.f32 %v45
    %v145 = vadd.s32 %v141, 3
    %v146 = vand.u32 %v145, 3
    %vm147 = vcmp.lt.s32.totalorder %v146, 2
    %vm148 = vcmp.eq.s32.totalorder %v146, 0
    %v149 = vxor.u32 %v143, 2147483648
    %v150 = vsel %vm148, %v142, %v149
    %vm151 = vcmp.eq.s32.totalorder %v146, 2
    %v152 = vxor.u32 %v142, 2147483648
    %v153 = vsel %vm151, %v152, %v143
    %v154 = vsel %vm147, %v150, %v153
    %v155 = vsel %vm144, nan, %v154
    %v156 = vadd.f32 %v38, 4.0
    %v157 = vrcp.pop %v156
    %v158 = vmul.f32 8.0, %v157
    %v159 = vsub.f32 %v158, 1.0
    %v160 = vand.u32 2147483647, %v45
    %vm161 = vcmp.le.f32.partialorder %v160, 0.7853982
    %vm162 = vcmp.lt.s32.totalorder %v45, 0
    %v163 = vand.u32 %v45, 2139095040
    %v164 = vshrl.u32 %v163, 23
    %v165 = vsub.s32 %v164, 127
    %v166 = vand.u32 2147483647, %v45
    %v167 = vand.u32 %v166, 8388607
    %v168 = vor.u32 %v167, 8388608
    %v169 = vsub.s32 0, %v168
    %v170 = vadd.s32 %v165, 1
    %vm171 = vcmp.gt.s32.totalorder %v170, 0
    %v172 = vsel %vm171, %v170, 0
    %v173 = vshrl.u32 %v172, 5
    %v174 = vand.u32 %v172, 31
    %v175 = vsub.s32 32, %v174
    %v176 = vshrl.u32 683565275, %v175
    %v177 = vshll.u32 683565275, %v174
    %v178 = vshrl.u32 2475754826, %v175
    %v179 = vor.u32 %v177, %v178
    %v180 = vshll.u32 2475754826, %v174
    %v181 = vshrl.u32 2131351028, %v175
    %v182 = vor.u32 %v180, %v181
    %v183 = vshll.u32 2131351028, %v174
    %v184 = vshrl.u32 2102212464, %v175
    %v185 = vor.u32 %v183, %v184
    %v186 = vshll.u32 2102212464, %v174
    %v187 = vshrl.u32 920167782, %v175
    %v188 = vor.u32 %v186, %v187
    %v189 = vshll.u32 920167782, %v174
    %v190 = vshrl.u32 1326507024, %v175
    %v191 = vor.u32 %v189, %v190
    %vm192 = vcmp.lt.s32.totalorder %v173, 1
    %vm193 = vcmp.lt.s32.totalorder %v173, 2
    %vm194 = vcmp.lt.s32.totalorder %v173, 3
    %vm195 = vcmp.lt.s32.totalorder %v173, 4
    %v196 = vsel %vm192, %v176, %v179
    %v197 = vsel %vm195, %v185, 2102212464
    %v198 = vsel %vm194, %v182, %v197
    %v199 = vsel %vm193, %v196, %v198
    %v200 = vsel %vm192, %v179, %v182
    %v201 = vsel %vm195, %v188, 920167782
    %v202 = vsel %vm194, %v185, %v201
    %v203 = vsel %vm193, %v200, %v202
    %v204 = vsel %vm192, %v182, %v185
    %v205 = vsel %vm195, %v191, 1326507024
    %v206 = vsel %vm194, %v188, %v205
    %v207 = vsel %vm193, %v204, %v206
    %v208 = vshll.u32 %v168, 8
    %v209 = vmul.u32.u64.compose %v208, %v207
    %v210 = vextract.low.u32 %v209
    %v211 = vextract.high.u32 %v209
    %v212 = vmul.u32.u64.compose %v208, %v203
    %v213 = vextract.low.u32 %v212
    %v214 = vextract.high.u32 %v212
    %v215 = vmul.u32 %v208, %v199
    %v216 = vadd.s32 %v211, %v213
    %vm217 = vc.u32 %v211, %v213
    %v218 = vadd.s32 %v214, 1
    %v219 = vsel %vm217, %v218, %v214
    %v220 = vadd.s32 %v215, %v219
    %v221 = vadd.s32 %v220, 536870912
    %v222 = vshrl.u32 %v221, 30
    %v223 = vshll.u32 %v222, 30
    %v224 = vsub.s32 %v220, %v223
    %vm225 = vcmp.lt.s32.totalorder %v224, 0
    %v226 = vsub.s32 0, %v224
    %v227 = vsel %vm225, %v226, %v224
    %v228 = vclz %v227
    %v229 = vsub.s32 %v228, 2
    %vm230 = vcmp.gt.s32.totalorder 0, %v229
    %v231 = vsel %vm230, 0, %v229
    %v232 = vsub.s32 32, %v231
    %v233 = vshll.u32 %v224, %v231
    %v234 = vshrl.u32 %v216, %v232
    %v235 = vor.u32 %v233, %v234
    %v236 = vsub.s32 4294967266, %v231
    %v237 = vadd.s32 %v236, 127
    %v238 = vshll.u32 %v237, 23
    %v239 = vor.u32 4788187, %v238
    %v240 = vand.u32 2147483647, %v239
    %v242 = vcvt.s32.f32 %v235
    %v243 = vmul.f32 %v242, %v240
    %v244 = vxor.u32 %v243, 2147483648
    %v245 = vsel %vm162, %v244, %v243
    %v246 = vsub.s32 4, %v222
    %v247 = vsel %vm162, %v246, %v222
    %v248 = vsel %vm161, %v45, %v245
    %v249 = vsel %vm161, 0, %v247
    %v250 = vcosq.f32.pop %v248
    %v251 = vsinq.f32.pop %v248
    %vm252 = vweird.f32 %v45
    %v253 = vand.u32 %v249, 3
    %vm254 = vcmp.lt.s32.totalorder %v253, 2
    %vm255 = vcmp.eq.s32.totalorder %v253, 0
    %v256 = vxor.u32 %v251, 2147483648
    %v257 = vsel %vm255, %v250, %v256
    %vm258 = vcmp.eq.s32.totalorder %v253, 2
    %v259 = vxor.u32 %v250, 2147483648
    %v260 = vsel %vm258, %v259, %v251
    %v261 = vsel %vm254, %v257, %v260
    %v262 = vsel %vm252, nan, %v261
    %v263 = vsel %vm46, %v159, %v262
    %v264 = vmul.f32 %v263, 0.5
    %v265 = vadd.f32 %v264, 0.5
    %v266 = vmul.f32 %v155, %v49
    %v267 = vsel %vm46, %v265, %v266
    %v268 = vmul.f32 %v267, 0.5
    %v269 = vsub.f32 1.0, %v263
    %v270 = vmul.f32 %v269, %v50
    %v271 = vsel %vm46, %v268, %v270
    %v272 = vmul.f32 %v271, %v29
    %v273 = vmul.f32 %v271, %v31
    %v274 = vmul.f32 %v271, %v33
    %v275 = vmul.f32 %v267, %v29
    %v276 = vmul.f32 %v267, %v31
    %v277 = vmul.f32 %v267, %v33
    %v278 = vmul.f32 %v272, %v31
    %v279 = vmul.f32 %v272, %v33
    %v280 = vmul.f32 %v273, %v33
    %v281 = vmul.f32 %v272, %v29
    %v282 = vadd.f32 %v281, %v263
    %v283 = vmul.f32 %v273, %v31
    %v284 = vadd.f32 %v283, %v263
    %v285 = vmul.f32 %v274, %v33
    %v286 = vadd.f32 %v285, %v263
    %v287 = vsub.f32 %v278, %v277
    %v288 = vadd.f32 %v278, %v277
    %v289 = vadd.f32 %v279, %v276
    %v290 = vsub.f32 %v279, %v276
    %v291 = vsub.f32 %v280, %v275
    %v292 = vadd.f32 %v280, %v275
    %v293 = vmul.f32 %v38, 0.16666667
    %v294 = vsub.f32 1.0, %v293
    %v295 = vsel %vm46, %v294, %v266
    %v296 = vmul.f32 %v38, 0.041666668
    %v297 = vsub.f32 0.5, %v296
    %v298 = vsel %vm46, %v297, %v270
    %v299 = vmul.f32 %v38, 0.008333334
    %v300 = vsub.f32 0.16666667, %v299
    %v301 = vsub.f32 %v45, %v155
    %v302 = vmul.f32 %v301, %v51
    %v303 = vsel %vm46, %v300, %v302
    %v304 = vmul.f32 %v31, %v27
    %v305 = vmul.f32 %v33, %v25
    %v306 = vsub.f32 %v304, %v305
    %v307 = vmul.f32 %v33, %v23
    %v308 = vmul.f32 %v29, %v27
    %v309 = vsub.f32 %v307, %v308
    %v310 = vmul.f32 %v29, %v25
    %v311 = vmul.f32 %v31, %v23
    %v312 = vsub.f32 %v310, %v311
    %v313 = vmul.f32 %v29, %v23
    %v314 = vmul.f32 %v31, %v25
    %v315 = vadd.f32 %v313, %v314
    %v316 = vmul.f32 %v33, %v27
    %v317 = vadd.f32 %v315, %v316
    %v318 = vmul.f32 %v303, %v317
    %v319 = vmul.f32 %v295, %v23
    %v320 = vmul.f32 %v298, %v306
    %v321 = vadd.f32 %v319, %v320
    %v322 = vmul.f32 %v318, %v29
    %v323 = vadd.f32 %v321, %v322
    %v324 = vmul.f32 %v295, %v25
    %v325 = vmul.f32 %v298, %v309
    %v326 = vadd.f32 %v324, %v325
    %v327 = vmul.f32 %v318, %v31
    %v328 = vadd.f32 %v326, %v327
    %v329 = vmul.f32 %v295, %v27
    %v330 = vmul.f32 %v298, %v312
    %v331 = vadd.f32 %v329, %v330
    %v332 = vmul.f32 %v318, %v33
    %v333 = vadd.f32 %v331, %v332
    %334 = vst [vmem:[#allocation5] sm:$0xff] %v282
    %s335 = scalar_lea.vmem [#allocation5], 8
    %336 = vst [vmem:[%s335] sm:$0xff] %v287
    %s337 = scalar_lea.vmem [#allocation5], 16
    %338 = vst [vmem:[%s337] sm:$0xff] %v289
    %s339 = scalar_lea.vmem [#allocation5], 24
    %340 = vst [vmem:[%s339] sm:$0xff] %v323
    %s341 = scalar_lea.vmem [#allocation5], 32
    %342 = vst [vmem:[%s341] sm:$0xff] %v288
    %s343 = scalar_lea.vmem [#allocation5], 40
    %344 = vst [vmem:[%s343] sm:$0xff] %v284
    %s345 = scalar_lea.vmem [#allocation5], 48
    %346 = vst [vmem:[%s345] sm:$0xff] %v291
    %s347 = scalar_lea.vmem [#allocation5], 56
    %348 = vst [vmem:[%s347] sm:$0xff] %v328
    %s349 = scalar_lea.vmem [#allocation5], 64
    %350 = vst [vmem:[%s349] sm:$0xff] %v290
    %s351 = scalar_lea.vmem [#allocation5], 72
    %352 = vst [vmem:[%s351] sm:$0xff] %v292
    %s353 = scalar_lea.vmem [#allocation5], 80
    %354 = vst [vmem:[%s353] sm:$0xff] %v286
    %s355 = scalar_lea.vmem [#allocation5], 88
    %356 = vst [vmem:[%s355] sm:$0xff] %v333
    // Predicated region
    $region10: #{tpu_custom_call.1} parent=1 // pred_check
      _
    $region11: #{tpu_custom_call.1} parent=1 // pred_check_branch
      %358 = sbr.rel (0) target = $region13
    $region12: #{tpu_custom_call.1} parent=1 // pred_region
      %s360 = ssub.s32 1536, 1536
      %361 = vsyncadd [#allocation4], %s360
      %s362 = sshll.u32 [#allocation5], 4
      %s363 = int_to_ptr.vmem [resolvable:$true] %s362
      %368 = dma.vmem_to_hbm [thread:$0]  %s363, 1536, %s1, [#allocation4], 128, 128, 8
    $region13: #{tpu_custom_call.1} parent=1 // pred_fallthru
      _
    // Predicated region
    $region14: #{tpu_custom_call.1} parent=1 // pred_check
      _
    $region15: #{tpu_custom_call.1} parent=1 // pred_check_branch
      %370 = sbr.rel (0) target = $region17
    $region16: #{tpu_custom_call.1} parent=1 // pred_region
      %371 = dma.done [#allocation4], 1536
    $region17: #{tpu_custom_call.1} parent=1 // pred_fallthru
      _
    %372 = vsyncpa [#allocation3], 1
    %373 = vsyncpa [#allocation4], 1

</llo_original>
